<compile_context>
chip_gen: v7x
topology: tpu7x:2x2x1
jax: 0.10.0
libtpu: 0.0.40
codegen_flags: <defaults>
</compile_context>

<pallas_src>
import jax
import jax.numpy as jnp
from jax.experimental import pallas as pl
from jax.experimental.pallas import tpu as pltpu


def _round_up(x: int, m: int) -> int:
    return (x + m - 1) // m * m


# -----------------------------------------------------------------------------
# Pallas kernel builder (static layer structure)
# -----------------------------------------------------------------------------
def _make_kernel(n_hidden, hidden_dims_out, hidden_inject, seg_offsets,
                 has_cov, last_inject):
    """Builds the FCLayers kernel for a fixed layer/injection structure.

    Ref layout (inputs, then output, then scratch):
      x, [oh], wx_hidden*, [wc_hidden_all], [shift_hidden_all],
      wx_last, [wc_last], shift_last, out, [h_scratch]
    """
    any_hidden_inject = has_cov and any(hidden_inject)

    def kernel(*refs):
        idx = 0
        x_ref = refs[idx]; idx += 1
        oh_ref = None
        if has_cov:
            oh_ref = refs[idx]; idx += 1
        wx_hid = refs[idx:idx + n_hidden]; idx += n_hidden
        wc_all_ref = None
        if any_hidden_inject:
            wc_all_ref = refs[idx]; idx += 1
        shift_all_ref = None
        if n_hidden > 0:
            shift_all_ref = refs[idx]; idx += 1
        wx_last_ref = refs[idx]; idx += 1
        wc_last_ref = None
        if last_inject:
            wc_last_ref = refs[idx]; idx += 1
        shift_last_ref = refs[idx]; idx += 1
        out_ref = refs[idx]; idx += 1
        h_ref = refs[idx] if n_hidden > 0 else None

        # ---- hidden chain: once per batch tile (first N-tile only) ----------
        if n_hidden > 0:
            @pl.when(pl.program_id(1) == 0)
            def _hidden_chain():
                h = x_ref[...]                            # bf16
                cov_all = None
                if any_hidden_inject:
                    # one tiny-K matmul amortized over all injected hidden layers
                    cov_all = jnp.dot(oh_ref[...], wc_all_ref[...],
                                      preferred_element_type=jnp.float32)
                shift_all = shift_all_ref[...]            # f32 (1, seg_total)
                for li in range(n_hidden):
                    d_out = hidden_dims_out[li]
                    off = seg_offsets[li]
                    z = jnp.dot(h, wx_hid[li][...],
                                preferred_element_type=jnp.float32)
                    if has_cov and hidden_inject[li]:
                        z = z + cov_all[:, off:off + d_out]
                    z = z + shift_all[:, off:off + d_out]  # bias+BN (folded)
                    z = jnp.maximum(z, 0.0)                # ReLU; Dropout = id
                    h = z.astype(jnp.bfloat16)
                h_ref[...] = h

        # ---- last layer: one N-tile per grid step ---------------------------
        h_last = h_ref[...] if n_hidden > 0 else x_ref[...]
        z = jnp.dot(h_last, wx_last_ref[...], preferred_element_type=jnp.float32)
        if last_inject:
            z = z + jnp.dot(oh_ref[...], wc_last_ref[...],
                            preferred_element_type=jnp.float32)
        z = z + shift_last_ref[...]
        z = jnp.maximum(z, 0.0)
        out_ref[...] = z.astype(out_ref.dtype)

    return kernel


# -----------------------------------------------------------------------------
# Wrapper: one-hot covariates, BN folding, packing, tiling, pallas_call
# -----------------------------------------------------------------------------
def fclayers_forward(params, x, cat_list=(), *, tile_b=512, tile_n=2048,
                     bn_eps=1e-3, out_dtype=jnp.float32,
                     vmem_budget_bytes=40 * 1024 * 1024):
    layers = params["layers"]
    n_cat_list = params["n_cat_list"]
    inject_covariates = params["inject_covariates"]
    n_layers = len(layers)
    B, n_in = x.shape

    # --- one-hot covariates (index or already-one-hot form, FCLayers concat)
    oh_parts = []
    for n_cat, cat in zip(n_cat_list, cat_list):
        if n_cat > 1:
            if cat.ndim == 2 and cat.shape[1] == n_cat:
                oh_parts.append(cat.astype(jnp.float32))
            else:
                oh_parts.append(jax.nn.one_hot(cat.reshape(-1), n_cat,
                                               dtype=jnp.float32))
    has_cov = len(oh_parts) > 0
    cat_dim = sum(p.shape[-1] for p in oh_parts) if has_cov else 0
    cat_dim_pad = _round_up(cat_dim, 16) if has_cov else 0   # bf16 sublane pack

    inject_flags = tuple(((i == 0) or inject_covariates) and has_cov
                         for i in range(n_layers))
    n_hidden = n_layers - 1
    hidden_inject = inject_flags[:n_hidden]
    last_inject = inject_flags[-1]
    any_hidden_inject = has_cov and any(hidden_inject)

    # --- fold Linear bias + eval BatchNorm1d: scale into weights (f32 fold,
    #     THEN bf16 cast), shift kept separate
    wx_s, wc_s, shifts = [], [], []
    for layer in layers:
        scale = layer["gamma"] / jnp.sqrt(layer["running_var"] + bn_eps)  # (1,d)
        shift = (layer["b"] - layer["running_mean"]) * scale + layer["beta"]
        wx_s.append((layer["wx"] * scale).astype(jnp.bfloat16))
        wc_s.append((layer["wc"] * scale).astype(jnp.bfloat16)
                    if layer["wc"] is not None else None)
        shifts.append(shift.astype(jnp.float32))

    # --- pack hidden layers: one combined Wc and one combined shift, with
    #     128-aligned segments per layer (lane-aligned slices in-kernel)
    hidden_dims_out, seg_offsets, seg_total = [], [], 0
    for li in range(n_hidden):
        d_out = wx_s[li].shape[1]
        hidden_dims_out.append(d_out)
        seg_offsets.append(seg_total)
        seg_total += _round_up(d_out, 128)

    shift_all, wc_all = None, None
    if n_hidden > 0:
        shift_all = jnp.zeros((1, seg_total), jnp.float32)
        for li in range(n_hidden):
            o, d = seg_offsets[li], hidden_dims_out[li]
            shift_all = shift_all.at[:, o:o + d].set(shifts[li])
        if any_hidden_inject:
            wc_all = jnp.zeros((cat_dim_pad, seg_total), jnp.bfloat16)
            for li in range(n_hidden):
                if hidden_inject[li]:
                    o, d = seg_offsets[li], hidden_dims_out[li]
                    wc_all = wc_all.at[:cat_dim, o:o + d].set(wc_s[li])

    # --- last layer: lane-dense slab + output-feature (N) tiling
    n_out = wx_s[-1].shape[1]
    n_out_pad = _round_up(n_out, 128)
    tile_n = min(_round_up(max(int(tile_n), 128), 128), n_out_pad)
    while n_out_pad % tile_n:        # largest 128-multiple divisor <= request
        tile_n -= 128
    d_in_last = wx_s[-1].shape[0]

    wx_last = jnp.pad(wx_s[-1], ((0, 0), (0, n_out_pad - n_out)))
    shift_last = jnp.pad(shifts[-1], ((0, 0), (0, n_out_pad - n_out)))
    wc_last = None
    if last_inject:
        wc_last = jnp.pad(wc_s[-1], ((0, cat_dim_pad - cat_dim),
                                     (0, n_out_pad - n_out)))

    out_bytes = 2 if out_dtype == jnp.bfloat16 else 4

    # --- VMEM bookkeeping -> batch tile size (budget-aware for v7x's 64 MiB)
    resident = sum(int(w.size) * 2 for w in wx_s[:n_hidden])        # Buffered(1)
    resident += int(wc_all.size) * 2 if wc_all is not None else 0
    resident += int(shift_all.size) * 4 if shift_all is not None else 0
    last_blk = 2 * (d_in_last * tile_n * 2 + tile_n * 4
                    + (cat_dim_pad * tile_n * 2 if last_inject else 0))
    per_row = (2 * 2 * n_in + (2 * 2 * cat_dim_pad if has_cov else 0)
               + 2 * out_bytes * tile_n
               + (2 * d_in_last if n_hidden > 0 else 0))

    tb = max(16, min(int(tile_b), _round_up(B, 16)))
    if B > 16:                        # keep >= 2 batch steps for megacore/v7x
        tb = min(tb, _round_up(max(B // 2, 16), 16))
    avail = vmem_budget_bytes - resident - last_blk
    if avail > 0:
        cap = (avail // max(per_row, 1)) // 16 * 16
        if cap >= 16:
            tb = min(tb, cap)
    tile_b = max(16, _round_up(tb, 16))
    b_pad = _round_up(B, tile_b)

    # --- specs / operands
    row_map = lambda i, j: (i, 0)
    const_map = lambda i, j: (0, 0)
    ncol_map = lambda i, j: (0, j)

    def _const_spec(shape):
        # constant blocks never change across grid steps: single-buffer them
        if hasattr(pl, "Buffered"):
            try:
                return pl.BlockSpec(shape, const_map, pipeline_mode=pl.Buffered(1))
            except TypeError:
                pass
        return pl.BlockSpec(shape, const_map)

    inputs = [jnp.pad(x, ((0, b_pad - B), (0, 0))).astype(jnp.bfloat16)]
    in_specs = [pl.BlockSpec((tile_b, n_in), row_map)]
    if has_cov:
        oh = jnp.concatenate(oh_parts, axis=-1)
        oh = jnp.pad(oh, ((0, b_pad - B), (0, cat_dim_pad - cat_dim)))
        inputs.append(oh.astype(jnp.bfloat16))
        in_specs.append(pl.BlockSpec((tile_b, cat_dim_pad), row_map))
    for li in range(n_hidden):
        inputs.append(wx_s[li])
        in_specs.append(_const_spec(wx_s[li].shape))
    if wc_all is not None:
        inputs.append(wc_all)
        in_specs.append(_const_spec(wc_all.shape))
    if shift_all is not None:
        inputs.append(shift_all)
        in_specs.append(_const_spec(shift_all.shape))
    inputs.append(wx_last)
    in_specs.append(pl.BlockSpec((d_in_last, tile_n), ncol_map))
    if last_inject:
        inputs.append(wc_last)
        in_specs.append(pl.BlockSpec((cat_dim_pad, tile_n), ncol_map))
    inputs.append(shift_last)
    in_specs.append(pl.BlockSpec((1, tile_n), ncol_map))

    scratch_shapes = []
    if n_hidden > 0:
        scratch_shapes.append(pltpu.VMEM((tile_b, d_in_last), jnp.bfloat16))

    # explicit scoped-VMEM limit with headroom (defaults of 16/32 MiB are too
    # small for wide scvi layers; stay below v7x's 64 MiB physical VMEM)
    est = resident + last_blk + per_row * tile_b
    vmem_limit = int(min(max(int(est * 1.4) + (4 << 20), 32 << 20), 56 << 20))

    kernel = _make_kernel(n_hidden, tuple(hidden_dims_out), tuple(hidden_inject),
                          tuple(seg_offsets), has_cov, last_inject)

    out = pl.pallas_call(
        kernel,
        out_shape=jax.ShapeDtypeStruct((b_pad, n_out_pad), out_dtype),
        grid=(b_pad // tile_b, n_out_pad // tile_n),
        in_specs=in_specs,
        out_specs=pl.BlockSpec((tile_b, tile_n), lambda i, j: (i, j)),
        scratch_shapes=scratch_shapes,
        compiler_params=pltpu.CompilerParams(
            dimension_semantics=("parallel", "arbitrary"),
            vmem_limit_bytes=vmem_limit),
    )(*inputs)

    return out[:B, :n_out]


# -----------------------------------------------------------------------------
# Pure-JAX reference mirroring the kernel's dtype/fold strategy (for checking)
# -----------------------------------------------------------------------------
def fclayers_reference(params, x, cat_list=(), *, bn_eps=1e-3):
    layers = params["layers"]
    n_cat_list = params["n_cat_list"]
    inject_covariates = params["inject_covariates"]

    oh_parts = []
    for n_cat, cat in zip(n_cat_list, cat_list):
        if n_cat > 1:
            if cat.ndim == 2 and cat.shape[1] == n_cat:
                oh_parts.append(cat.astype(jnp.float32))
            else:
                oh_parts.append(jax.nn.one_hot(cat.reshape(-1), n_cat,
                                               dtype=jnp.float32))
    oh = jnp.concatenate(oh_parts, axis=-1) if oh_parts else None
    oh16 = oh.astype(jnp.bfloat16) if oh is not None else None

    h = x.astype(jnp.bfloat16)
    z = None
    for i, layer in enumerate(layers):
        inject = ((i == 0) or inject_covariates) and oh is not None
        scale = layer["gamma"] / jnp.sqrt(layer["running_var"] + bn_eps)
        shift = (layer["b"] - layer["running_mean"]) * scale + layer["beta"]
        z = jnp.dot(h, (layer["wx"] * scale).astype(jnp.bfloat16),
                    preferred_element_type=jnp.float32)
        if inject:
            z = z + jnp.dot(oh16, (layer["wc"] * scale).astype(jnp.bfloat16),
                            preferred_element_type=jnp.float32)
        z = z + shift
        z = jnp.maximum(z, 0.0)
        h = z.astype(jnp.bfloat16)
    return z


# -----------------------------------------------------------------------------
# Deterministic parameter init (PyTorch nn.Linear / BatchNorm1d style)
# -----------------------------------------------------------------------------
def init_fclayers(key, n_in, n_out, n_cat_list=None, n_layers=1, n_hidden=128,
                  inject_covariates=True):
    n_cat_list = [] if n_cat_list is None else [c if c > 1 else 0 for c in n_cat_list]
    cat_dim = sum(n_cat_list)
    dims = [n_in] + (n_layers - 1) * [n_hidden] + [n_out]

    layers = []
    for i, (d_in, d_out) in enumerate(zip(dims[:-1], dims[1:])):
        inject = (i == 0) or inject_covariates
        fan_in = d_in + cat_dim * int(inject)
        key, kw, kb, k1, k2, k3, k4 = jax.random.split(key, 7)
        bound = 1.0 / (fan_in ** 0.5)
        w_full = jax.random.uniform(kw, (fan_in, d_out), jnp.float32, -bound, bound)
        wx = w_full[:d_in]
        wc = w_full[d_in:] if (inject and cat_dim > 0) else None
        b = jax.random.uniform(kb, (1, d_out), jnp.float32, -bound, bound)
        # non-trivial running stats so eval-mode BN actually does something
        gamma = jax.random.uniform(k1, (1, d_out), jnp.float32, 0.5, 1.5)
        beta = 0.1 * jax.random.normal(k2, (1, d_out), jnp.float32)
        running_mean = 0.1 * jax.random.normal(k3, (1, d_out), jnp.float32)
        running_var = jax.random.uniform(k4, (1, d_out), jnp.float32, 0.5, 1.5)
        layers.append(dict(wx=wx, wc=wc, b=b, gamma=gamma, beta=beta,
                           running_mean=running_mean, running_var=running_var))
    return dict(layers=layers, n_cat_list=n_cat_list,
                inject_covariates=inject_covariates)


if __name__ == "__main__":
    key = jax.random.PRNGKey(0)
    k_x, k_c, k_p, k_x2, k_c2, k_p2 = jax.random.split(key, 6)

    # config 1: 2 FC layers, one categorical covariate (3 classes), f32 output
    B, n_in, n_hid, n_out = 32, 32, 32, 24
    x = jax.random.normal(k_x, (B, n_in), jnp.float32)
    cat = jax.random.randint(k_c, (B, 1), 0, 3)
    params = init_fclayers(k_p, n_in, n_out, n_cat_list=[3], n_layers=2,
                           n_hidden=n_hid, inject_covariates=True)
    out = fclayers_forward(params, x, (cat,))
    jax.block_until_ready(out)
    ref = fclayers_reference(params, x, (cat,))
    assert out.shape == (B, n_out)
    assert bool(jnp.all(jnp.isfinite(out)))
    assert bool(jnp.allclose(out, ref, atol=2e-3, rtol=2e-3)), \
        float(jnp.max(jnp.abs(out - ref)))

    # config 2: 3 layers, two covariates, N-tiled last layer, bf16 output slab
    B2, n_in2, n_hid2, n_out2 = 24, 48, 32, 160
    x2 = jax.random.normal(k_x2, (B2, n_in2), jnp.float32)
    c2a = jax.random.randint(k_c2, (B2, 1), 0, 3)
    c2b = jax.random.randint(jax.random.fold_in(k_c2, 1), (B2, 1), 0, 5)
    params2 = init_fclayers(k_p2, n_in2, n_out2, n_cat_list=[3, 5], n_layers=3,
                            n_hidden=n_hid2, inject_covariates=True)
    out2 = fclayers_forward(params2, x2, (c2a, c2b), tile_n=128,
                            out_dtype=jnp.bfloat16)
    jax.block_until_ready(out2)
    ref2 = fclayers_reference(params2, x2, (c2a, c2b))
    assert out2.shape == (B2, n_out2)
    assert bool(jnp.all(jnp.isfinite(out2.astype(jnp.float32))))
    assert bool(jnp.allclose(out2.astype(jnp.float32),
                             ref2.astype(jnp.bfloat16).astype(jnp.float32),
                             atol=3e-2, rtol=3e-2))

    print("KERNEL_OK")
</pallas_src>

<mosaic_0001>
module attributes {stable_mosaic.version = 11 : i64} {
  func.func @kernel(%arg0: i32, %arg1: i32, %arg2: memref<16x32xbf16, #tpu.memory_space<vmem>>, %arg3: memref<16x16xbf16, #tpu.memory_space<vmem>>, %arg4: memref<32x32xbf16, #tpu.memory_space<vmem>>, %arg5: memref<16x128xbf16, #tpu.memory_space<vmem>>, %arg6: memref<1x128xf32, #tpu.memory_space<vmem>>, %arg7: memref<32x128xbf16, #tpu.memory_space<vmem>>, %arg8: memref<16x128xbf16, #tpu.memory_space<vmem>>, %arg9: memref<1x128xf32, #tpu.memory_space<vmem>>, %arg10: memref<16x128xf32, #tpu.memory_space<vmem>>, %arg11: memref<16x32xbf16, #tpu.memory_space<vmem>>) attributes {dimension_semantics = [#tpu.dimension_semantics<parallel>, #tpu.dimension_semantics<arbitrary>], iteration_bounds = array<i64: 2, 1>, scalar_prefetch = 0 : i64, scratch_operands = 1 : i64, tpu.core_type = #tpu.core_type<tc>, window_params = [{transform_indices = @transform_0, window_bounds = array<i64: 16, 32>}, {transform_indices = @transform_1, window_bounds = array<i64: 16, 16>}, {pipeline_mode = #tpu.pipeline_mode<synchronous>, transform_indices = @transform_2, window_bounds = array<i64: 32, 32>}, {pipeline_mode = #tpu.pipeline_mode<synchronous>, transform_indices = @transform_3, window_bounds = array<i64: 16, 128>}, {pipeline_mode = #tpu.pipeline_mode<synchronous>, transform_indices = @transform_4, window_bounds = array<i64: 1, 128>}, {transform_indices = @transform_5, window_bounds = array<i64: 32, 128>}, {transform_indices = @transform_6, window_bounds = array<i64: 16, 128>}, {transform_indices = @transform_7, window_bounds = array<i64: 1, 128>}, {transform_indices = @transform_8, window_bounds = array<i64: 16, 128>}]} {
    %c0_i32 = arith.constant 0 : i32
    %0 = arith.cmpi eq, %arg1, %c0_i32 : i32
    %1 = arith.extui %0 : i1 to i32
    %c0_i32_0 = arith.constant 0 : i32
    %2 = arith.cmpi ne, %1, %c0_i32_0 : i32
    scf.if %2 {
      %c0_14 = arith.constant 0 : index
      %c0_15 = arith.constant 0 : index
      %16 = vector.load %arg2[%c0_14, %c0_15] : memref<16x32xbf16, #tpu.memory_space<vmem>>, vector<16x32xbf16>
      %c0_16 = arith.constant 0 : index
      %c0_17 = arith.constant 0 : index
      %17 = vector.load %arg3[%c0_16, %c0_17] : memref<16x16xbf16, #tpu.memory_space<vmem>>, vector<16x16xbf16>
      %c0_18 = arith.constant 0 : index
      %c0_19 = arith.constant 0 : index
      %18 = vector.load %arg5[%c0_18, %c0_19] : memref<16x128xbf16, #tpu.memory_space<vmem>>, vector<16x128xbf16>
      %cst_20 = arith.constant dense<0.000000e+00> : vector<16x128xf32>
      %19 = tpu.matmul %17, %18, %cst_20 {dimension_numbers = #tpu.dot_dimension_numbers<[1], [0], [0], [1], [0, 0, 1, 1], [], []>} : vector<16x16xbf16>, vector<16x128xbf16>, vector<16x128xf32> -> vector<16x128xf32>
      %c0_21 = arith.constant 0 : index
      %c0_22 = arith.constant 0 : index
      %20 = vector.load %arg6[%c0_21, %c0_22] : memref<1x128xf32, #tpu.memory_space<vmem>>, vector<1x128xf32>
      %c0_23 = arith.constant 0 : index
      %c0_24 = arith.constant 0 : index
      %21 = vector.load %arg4[%c0_23, %c0_24] : memref<32x32xbf16, #tpu.memory_space<vmem>>, vector<32x32xbf16>
      %cst_25 = arith.constant dense<0.000000e+00> : vector<16x32xf32>
      %22 = tpu.matmul %16, %21, %cst_25 {dimension_numbers = #tpu.dot_dimension_numbers<[1], [0], [0], [1], [0, 0, 1, 1], [], []>} : vector<16x32xbf16>, vector<32x32xbf16>, vector<16x32xf32> -> vector<16x32xf32>
      %23 = vector.extract_strided_slice %19 {offsets = [0, 0], sizes = [16, 32], strides = [1, 1]} : vector<16x128xf32> to vector<16x32xf32>
      %24 = arith.addf %22, %23 : vector<16x32xf32>
      %25 = vector.extract_strided_slice %20 {offsets = [0, 0], sizes = [1, 32], strides = [1, 1]} : vector<1x128xf32> to vector<1x32xf32>
      %26 = vector.broadcast %25 : vector<1x32xf32> to vector<16x32xf32>
      %27 = arith.addf %24, %26 : vector<16x32xf32>
      %cst_26 = arith.constant 0.000000e+00 : f32
      %28 = vector.broadcast %cst_26 : f32 to vector<16x32xf32>
      %29 = arith.maximumf %27, %28 : vector<16x32xf32>
      %30 = arith.truncf %29 : vector<16x32xf32> to vector<16x32xbf16>
      %c0_27 = arith.constant 0 : index
      %c0_28 = arith.constant 0 : index
      %31 = vector.load %arg11[%c0_27, %c0_28] : memref<16x32xbf16, #tpu.memory_space<vmem>>, vector<16x32xbf16>
      tpu.vector_store %arg11[%c0_27, %c0_28], %30 {strides = array<i32>} : memref<16x32xbf16, #tpu.memory_space<vmem>>, vector<16x32xbf16>,
    } else {
    }
    %c0 = arith.constant 0 : index
    %c0_1 = arith.constant 0 : index
    %3 = vector.load %arg11[%c0, %c0_1] : memref<16x32xbf16, #tpu.memory_space<vmem>>, vector<16x32xbf16>
    %c0_2 = arith.constant 0 : index
    %c0_3 = arith.constant 0 : index
    %4 = vector.load %arg7[%c0_2, %c0_3] : memref<32x128xbf16, #tpu.memory_space<vmem>>, vector<32x128xbf16>
    %cst = arith.constant dense<0.000000e+00> : vector<16x128xf32>
    %5 = tpu.matmul %3, %4, %cst {dimension_numbers = #tpu.dot_dimension_numbers<[1], [0], [0], [1], [0, 0, 1, 1], [], []>} : vector<16x32xbf16>, vector<32x128xbf16>, vector<16x128xf32> -> vector<16x128xf32>
    %c0_4 = arith.constant 0 : index
    %c0_5 = arith.constant 0 : index
    %6 = vector.load %arg3[%c0_4, %c0_5] : memref<16x16xbf16, #tpu.memory_space<vmem>>, vector<16x16xbf16>
    %c0_6 = arith.constant 0 : index
    %c0_7 = arith.constant 0 : index
    %7 = vector.load %arg8[%c0_6, %c0_7] : memref<16x128xbf16, #tpu.memory_space<vmem>>, vector<16x128xbf16>
    %cst_8 = arith.constant dense<0.000000e+00> : vector<16x128xf32>
    %8 = tpu.matmul %6, %7, %cst_8 {dimension_numbers = #tpu.dot_dimension_numbers<[1], [0], [0], [1], [0, 0, 1, 1], [], []>} : vector<16x16xbf16>, vector<16x128xbf16>, vector<16x128xf32> -> vector<16x128xf32>
    %9 = arith.addf %5, %8 : vector<16x128xf32>
    %c0_9 = arith.constant 0 : index
    %c0_10 = arith.constant 0 : index
    %10 = vector.load %arg9[%c0_9, %c0_10] : memref<1x128xf32, #tpu.memory_space<vmem>>, vector<1x128xf32>
    %11 = vector.broadcast %10 : vector<1x128xf32> to vector<16x128xf32>
    %12 = arith.addf %9, %11 : vector<16x128xf32>
    %cst_11 = arith.constant 0.000000e+00 : f32
    %13 = vector.broadcast %cst_11 : f32 to vector<16x128xf32>
    %14 = arith.maximumf %12, %13 : vector<16x128xf32>
    %c0_12 = arith.constant 0 : index
    %c0_13 = arith.constant 0 : index
    %15 = vector.load %arg10[%c0_12, %c0_13] : memref<16x128xf32, #tpu.memory_space<vmem>>, vector<16x128xf32>
    tpu.vector_store %arg10[%c0_12, %c0_13], %14 {strides = array<i32>} : memref<16x128xf32, #tpu.memory_space<vmem>>, vector<16x128xf32>,
    return
  }
  func.func @transform_0(%arg0: i32, %arg1: i32) -> (i32, i32) {
    %c0_i32 = arith.constant 0 : i32
    %c0_i32_0 = arith.constant 0 : i32
    return %arg0, %c0_i32 : i32, i32
  }
  func.func @transform_1(%arg0: i32, %arg1: i32) -> (i32, i32) {
    %c0_i32 = arith.constant 0 : i32
    %c0_i32_0 = arith.constant 0 : i32
    return %arg0, %c0_i32 : i32, i32
  }
  func.func @transform_2(%arg0: i32, %arg1: i32) -> (i32, i32) {
    %c0_i32 = arith.constant 0 : i32
    %c0_i32_0 = arith.constant 0 : i32
    %c0_i32_1 = arith.constant 0 : i32
    return %c0_i32, %c0_i32_0 : i32, i32
  }
  func.func @transform_3(%arg0: i32, %arg1: i32) -> (i32, i32) {
    %c0_i32 = arith.constant 0 : i32
    %c0_i32_0 = arith.constant 0 : i32
    %c0_i32_1 = arith.constant 0 : i32
    return %c0_i32, %c0_i32_0 : i32, i32
  }
  func.func @transform_4(%arg0: i32, %arg1: i32) -> (i32, i32) {
    %c0_i32 = arith.constant 0 : i32
    %c0_i32_0 = arith.constant 0 : i32
    %c0_i32_1 = arith.constant 0 : i32
    return %c0_i32, %c0_i32_0 : i32, i32
  }
  func.func @transform_5(%arg0: i32, %arg1: i32) -> (i32, i32) {
    %c0_i32 = arith.constant 0 : i32
    %c0_i32_0 = arith.constant 0 : i32
    return %c0_i32, %arg1 : i32, i32
  }
  func.func @transform_6(%arg0: i32, %arg1: i32) -> (i32, i32) {
    %c0_i32 = arith.constant 0 : i32
    %c0_i32_0 = arith.constant 0 : i32
    return %c0_i32, %arg1 : i32, i32
  }
  func.func @transform_7(%arg0: i32, %arg1: i32) -> (i32, i32) {
    %c0_i32 = arith.constant 0 : i32
    %c0_i32_0 = arith.constant 0 : i32
    return %c0_i32, %arg1 : i32, i32
  }
  func.func @transform_8(%arg0: i32, %arg1: i32) -> (i32, i32) {
    %c0_i32 = arith.constant 0 : i32
    return %arg0, %arg1 : i32, i32
  }
}

</mosaic_0001>

<llo_original>
// kernel: tpu_custom_call.1
$region0: #{tpu_custom_call.1}
  #allocation0 [shape = 'u32[]', space=smem, size = 0x4, offset = 0x4, fixed_abs, tag = 'smem constant byte address 0x4 - core index']
  #allocation1 [shape = 'u32[144,128]{1,0:T(1,128)}', space=vmem, size = 0x12000, scoped, tag = 'internal scratch']
  #allocation2 [shape = 'bf16[16,32]{1,0:T(16,128)(2,1)}', space=vmem, size = 0x1000, scoped, tag = 'scratch operand']
  %s0 = inlined_call_operand.vmem [shape: bf16[32,32], index: 0, kind: input, shape index: {}]
  %s1 = inlined_call_operand.vmem [shape: bf16[32,16], index: 1, kind: input, shape index: {}]
  %s2 = inlined_call_operand.hbm [shape: bf16[32,32], index: 2, kind: input, shape index: {}]
  %s3 = inlined_call_operand.hbm [shape: bf16[16,128], index: 3, kind: input, shape index: {}]
  %s4 = inlined_call_operand.vmem [shape: f32[1,128], index: 4, kind: input, shape index: {}]
  %s5 = inlined_call_operand.vmem [shape: bf16[32,128], index: 5, kind: input, shape index: {}]
  %s6 = inlined_call_operand.vmem [shape: bf16[16,128], index: 6, kind: input, shape index: {}]
  %s7 = inlined_call_operand.vmem [shape: f32[1,128], index: 7, kind: input, shape index: {}]
  %s8 = inlined_call_operand.hbm [shape: f32[32,128], index: 8, kind: output, shape index: {}]
  %s9 = sld [smem:[#allocation0]]
  $region77: #{tpu_custom_call.1} parent=0
    _
  %s11 = ssub.s32 1, %s9
  %s12 = scalar_select 0, %s11, %s9
  $region1: #{tpu_custom_call.1} parent=0
    #allocation3 [shape = 'u8[8192]{0}', space=vmem, size = 0x2000, scoped, tag = 'input window, operand 2, single buffered']
    #allocation4 [shape = 's32[2]{0}', space=sflag, size = 0x8, scoped, tag = 'scoped memory for tpu_custom_call.1']
    #allocation5 [shape = 's32[2]{0}', space=sflag, size = 0x8, scoped, tag = 'scoped memory for tpu_custom_call.1']
    #allocation6 [shape = 'u8[4096]{0}', space=vmem, size = 0x1000, scoped, tag = 'input window, operand 3, single buffered']
    #allocation7 [shape = 's32[1]{0}', space=sflag, size = 0x4, scoped, tag = 'scoped memory for tpu_custom_call.1']
    #allocation8 [shape = 'u8[16384]{0}', space=vmem, size = 0x4000, scoped, tag = 'output window, operand 0']
    %13 = vsyncpa [#allocation4], 0
    %14 = vsyncpa [#allocation7], 0
    %15 = vsyncpa [#allocation5], 0
    %s16 = scalar_lea.sflag [#allocation5], 1
    %17 = vsyncpa %s16, 0
    loop: start=0, step=1, limit=4
    $region2: #{tpu_custom_call.1} parent=1 // loop_pre_header
      _
    $region3: #{tpu_custom_call.1} parent=1 // loop_header
      %s19 = sphi 0, %s23
      %p20 = scmp.ge.s32.totalorder %s19, 4
      %s26 = sphi 0, %s38
      %s27 = sphi 0, %s34
      %s28 = sphi 0, %s26
      %s29 = sphi 0, %s27
      %s30 = sphi 0, %s28
      %s31 = sphi 0, %s29
      %s41 = sphi 0, %s43
      %s44 = sphi 0, %s41
      %s45 = sphi 0, %s44
      %s61 = sphi 0, %s45
      %s67 = sphi 0, %s69
      %s70 = sphi 0, %s67
      %s71 = sphi 0, %s70
      %s87 = sphi 0, %s71
      %s91 = sphi 0, %s91
      %s93 = sphi 0, %s91
      %s94 = sphi 0, %s93
      %s108 = sphi 0, %s94
      %s112 = sphi 0, %s112
      %s114 = sphi 0, %s112
      %s115 = sphi 0, %s114
      %s129 = sphi 0, %s115
      %s133 = sphi 0, %s133
      %s135 = sphi 0, %s133
      %s136 = sphi 0, %s135
      %s150 = sphi 0, %s136
      %s156 = sphi 0, %s158
      %s159 = sphi 0, %s156
      %s160 = sphi 0, %s159
      %s176 = sphi 0, %s160
      %s182 = sphi 0, %s184
      %s185 = sphi 0, %s182
      %s186 = sphi 0, %s185
      %s202 = sphi 0, %s186
      %s208 = sphi 0, %s210
      %s211 = sphi 0, %s208
      %s212 = sphi 0, %s211
      %s228 = sphi 0, %s212
      %s236 = sphi 0, %s238
      %s239 = sphi 0, %s236
      %s240 = sphi 0, %s239
      %s256 = sphi 0, %s240
    $region4: #{tpu_custom_call.1} parent=1 // loop_header_branch
      %22 = sbr.rel (%p20) target = $region8
    $region5: #{tpu_custom_call.1} parent=1 // loop_body
      %s24 = ssub.s32 %s19, 1
      %s25 = ssub.s32 %s19, 2
      %s32 = sadd.s32 1, %s27
      %p33 = scmp.ge.s32.totalorder %s32, 1
      %s34 = scalar_select %p33, 0, %s32
      %s35 = sadd.s32 1, %s26
      %s36 = scalar_select %p33, %s35, %s26
      %p37 = scmp.ge.s32.totalorder %s36, 2
      %s38 = scalar_select %p37, 0, %s36
      %s39 = ssub.s32 %s26, %s38
      %p40 = scmp.eq.s32.totalorder %s39, 0
      %s42 = sadd.s32 %s41, 1
      %s43 = scalar_select %p40, %s41, %s42
      %p46 = pneg %p40
      %p47 = scmp.eq.s32.totalorder %s19, 1
      %p48 = por %p46, %p47
      %p49 = scmp.ne.s32.totalorder %s41, %s44
      %p50 = scmp.eq.s32.totalorder %s19, 0
      %p51 = por %p49, %p50
      %p52 = scmp.ne.s32.totalorder %s41, %s44
      %p53 = scmp.eq.s32.totalorder %s24, 1
      %p54 = por %p52, %p53
      %p55 = scmp.ne.s32.totalorder %s44, %s45
      %p56 = scmp.eq.s32.totalorder %s24, 0
      %p57 = por %p55, %p56
      %p58 = scmp.ne.s32.totalorder %s44, %s45
      %p59 = scmp.eq.s32.totalorder %s25, 1
      %p60 = por %p58, %p59
      %p62 = scmp.ne.s32.totalorder %s45, %s61
      %p63 = scmp.eq.s32.totalorder %s25, 0
      %p64 = por %p62, %p63
      %s65 = ssub.s32 %s26, %s38
      %p66 = scmp.eq.s32.totalorder %s65, 0
      %s68 = sadd.s32 %s67, 1
      %s69 = scalar_select %p66, %s67, %s68
      %p72 = pneg %p66
      %p73 = scmp.eq.s32.totalorder %s19, 1
      %p74 = por %p72, %p73
      %p75 = scmp.ne.s32.totalorder %s67, %s70
      %p76 = scmp.eq.s32.totalorder %s19, 0
      %p77 = por %p75, %p76
      %p78 = scmp.ne.s32.totalorder %s67, %s70
      %p79 = scmp.eq.s32.totalorder %s24, 1
      %p80 = por %p78, %p79
      %p81 = scmp.ne.s32.totalorder %s70, %s71
      %p82 = scmp.eq.s32.totalorder %s24, 0
      %p83 = por %p81, %p82
      %p84 = scmp.ne.s32.totalorder %s70, %s71
      %p85 = scmp.eq.s32.totalorder %s25, 1
      %p86 = por %p84, %p85
      %p88 = scmp.ne.s32.totalorder %s71, %s87
      %p89 = scmp.eq.s32.totalorder %s25, 0
      %p90 = por %p88, %p89
      %s92 = sadd.s32 %s91, 1
      %p95 = scmp.eq.s32.totalorder %s19, 1
      %p96 = scmp.ne.s32.totalorder %s91, %s93
      %p97 = scmp.eq.s32.totalorder %s19, 0
      %p98 = por %p96, %p97
      %p99 = scmp.ne.s32.totalorder %s91, %s93
      %p100 = scmp.eq.s32.totalorder %s24, 1
      %p101 = por %p99, %p100
      %p102 = scmp.ne.s32.totalorder %s93, %s94
      %p103 = scmp.eq.s32.totalorder %s24, 0
      %p104 = por %p102, %p103
      %p105 = scmp.ne.s32.totalorder %s93, %s94
      %p106 = scmp.eq.s32.totalorder %s25, 1
      %p107 = por %p105, %p106
      %p109 = scmp.ne.s32.totalorder %s94, %s108
      %p110 = scmp.eq.s32.totalorder %s25, 0
      %p111 = por %p109, %p110
      %s113 = sadd.s32 %s112, 1
      %p116 = scmp.eq.s32.totalorder %s19, 1
      %p117 = scmp.ne.s32.totalorder %s112, %s114
      %p118 = scmp.eq.s32.totalorder %s19, 0
      %p119 = por %p117, %p118
      %p120 = scmp.ne.s32.totalorder %s112, %s114
      %p121 = scmp.eq.s32.totalorder %s24, 1
      %p122 = por %p120, %p121
      %p123 = scmp.ne.s32.totalorder %s114, %s115
      %p124 = scmp.eq.s32.totalorder %s24, 0
      %p125 = por %p123, %p124
      %p126 = scmp.ne.s32.totalorder %s114, %s115
      %p127 = scmp.eq.s32.totalorder %s25, 1
      %p128 = por %p126, %p127
      %p130 = scmp.ne.s32.totalorder %s115, %s129
      %p131 = scmp.eq.s32.totalorder %s25, 0
      %p132 = por %p130, %p131
      %s134 = sadd.s32 %s133, 1
      %p137 = scmp.eq.s32.totalorder %s19, 1
      %p138 = scmp.ne.s32.totalorder %s133, %s135
      %p139 = scmp.eq.s32.totalorder %s19, 0
      %p140 = por %p138, %p139
      %p141 = scmp.ne.s32.totalorder %s133, %s135
      %p142 = scmp.eq.s32.totalorder %s24, 1
      %p143 = por %p141, %p142
      %p144 = scmp.ne.s32.totalorder %s135, %s136
      %p145 = scmp.eq.s32.totalorder %s24, 0
      %p146 = por %p144, %p145
      %p147 = scmp.ne.s32.totalorder %s135, %s136
      %p148 = scmp.eq.s32.totalorder %s25, 1
      %p149 = por %p147, %p148
      %p151 = scmp.ne.s32.totalorder %s136, %s150
      %p152 = scmp.eq.s32.totalorder %s25, 0
      %p153 = por %p151, %p152
      %s154 = ssub.s32 %s27, %s34
      %p155 = scmp.eq.s32.totalorder %s154, 0
      %s157 = sadd.s32 %s156, 1
      %s158 = scalar_select %p155, %s156, %s157
      %p161 = pneg %p155
      %p162 = scmp.eq.s32.totalorder %s19, 1
      %p163 = por %p161, %p162
      %p164 = scmp.ne.s32.totalorder %s156, %s159
      %p165 = scmp.eq.s32.totalorder %s19, 0
      %p166 = por %p164, %p165
      %p167 = scmp.ne.s32.totalorder %s156, %s159
      %p168 = scmp.eq.s32.totalorder %s24, 1
      %p169 = por %p167, %p168
      %p170 = scmp.ne.s32.totalorder %s159, %s160
      %p171 = scmp.eq.s32.totalorder %s24, 0
      %p172 = por %p170, %p171
      %p173 = scmp.ne.s32.totalorder %s159, %s160
      %p174 = scmp.eq.s32.totalorder %s25, 1
      %p175 = por %p173, %p174
      %p177 = scmp.ne.s32.totalorder %s160, %s176
      %p178 = scmp.eq.s32.totalorder %s25, 0
      %p179 = por %p177, %p178
      %s180 = ssub.s32 %s27, %s34
      %p181 = scmp.eq.s32.totalorder %s180, 0
      %s183 = sadd.s32 %s182, 1
      %s184 = scalar_select %p181, %s182, %s183
      %p187 = pneg %p181
      %p188 = scmp.eq.s32.totalorder %s19, 1
      %p189 = por %p187, %p188
      %p190 = scmp.ne.s32.totalorder %s182, %s185
      %p191 = scmp.eq.s32.totalorder %s19, 0
      %p192 = por %p190, %p191
      %p193 = scmp.ne.s32.totalorder %s182, %s185
      %p194 = scmp.eq.s32.totalorder %s24, 1
      %p195 = por %p193, %p194
      %p196 = scmp.ne.s32.totalorder %s185, %s186
      %p197 = scmp.eq.s32.totalorder %s24, 0
      %p198 = por %p196, %p197
      %p199 = scmp.ne.s32.totalorder %s185, %s186
      %p200 = scmp.eq.s32.totalorder %s25, 1
      %p201 = por %p199, %p200
      %p203 = scmp.ne.s32.totalorder %s186, %s202
      %p204 = scmp.eq.s32.totalorder %s25, 0
      %p205 = por %p203, %p204
      %s206 = ssub.s32 %s27, %s34
      %p207 = scmp.eq.s32.totalorder %s206, 0
      %s209 = sadd.s32 %s208, 1
      %s210 = scalar_select %p207, %s208, %s209
      %p213 = pneg %p207
      %p214 = scmp.eq.s32.totalorder %s19, 1
      %p215 = por %p213, %p214
      %p216 = scmp.ne.s32.totalorder %s208, %s211
      %p217 = scmp.eq.s32.totalorder %s19, 0
      %p218 = por %p216, %p217
      %p219 = scmp.ne.s32.totalorder %s208, %s211
      %p220 = scmp.eq.s32.totalorder %s24, 1
      %p221 = por %p219, %p220
      %p222 = scmp.ne.s32.totalorder %s211, %s212
      %p223 = scmp.eq.s32.totalorder %s24, 0
      %p224 = por %p222, %p223
      %p225 = scmp.ne.s32.totalorder %s211, %s212
      %p226 = scmp.eq.s32.totalorder %s25, 1
      %p227 = por %p225, %p226
      %p229 = scmp.ne.s32.totalorder %s212, %s228
      %p230 = scmp.eq.s32.totalorder %s25, 0
      %p231 = por %p229, %p230
      %s232 = ssub.s32 %s26, %s38
      %s233 = ssub.s32 %s27, %s34
      %s234 = sor.u32 %s232, %s233
      %p235 = scmp.eq.s32.totalorder %s234, 0
      %s237 = sadd.s32 %s236, 1
      %s238 = scalar_select %p235, %s236, %s237
      %p241 = pneg %p235
      %p242 = scmp.eq.s32.totalorder %s19, 1
      %p243 = por %p241, %p242
      %p244 = scmp.ne.s32.totalorder %s236, %s239
      %p245 = scmp.eq.s32.totalorder %s19, 0
      %p246 = por %p244, %p245
      %p247 = scmp.ne.s32.totalorder %s236, %s239
      %p248 = scmp.eq.s32.totalorder %s24, 1
      %p249 = por %p247, %p248
      %p250 = scmp.ne.s32.totalorder %s239, %s240
      %p251 = scmp.eq.s32.totalorder %s24, 0
      %p252 = por %p250, %p251
      %p253 = scmp.ne.s32.totalorder %s239, %s240
      %p254 = scmp.eq.s32.totalorder %s25, 1
      %p255 = por %p253, %p254
      %p257 = scmp.ne.s32.totalorder %s240, %s256
      %p258 = scmp.eq.s32.totalorder %s25, 0
      %p259 = por %p257, %p258
      %p260 = scmp.le.s32.totalorder 1, %s19
      %p261 = scmp.lt.s32.totalorder %s19, 3
      %p262 = pnand %p260, %p261
      %p263 = pneg %p262
      // Predicated region
      $region9: #{tpu_custom_call.1} parent=5 // pred_check
        _
      $region10: #{tpu_custom_call.1} parent=5 // pred_check_branch
        %265 = sbr.rel (%p262) target = $region12
      $region11: #{tpu_custom_call.1} parent=5 // pred_region
        %s266 = ssub.s32 %s19, 1
        // Predicated region
        $region13: #{tpu_custom_call.1} parent=11 // pred_check
          %p267 = pneg %p104
        $region14: #{tpu_custom_call.1} parent=11 // pred_check_branch
          %269 = sbr.rel (%p267) target = $region16
        $region15: #{tpu_custom_call.1} parent=11 // pred_region
          %s271 = ssub.s32 256, 256
          %272 = vsyncadd [#allocation4], %s271
          %s273 = sshll.u32 [#allocation3], 4
          %s274 = int_to_ptr.vmem [resolvable:$true] %s273
          %279 = dma.hbm_to_vmem [thread:$0]  %s2, 256, %s274, [#allocation4], 64, 64, 4
        $region16: #{tpu_custom_call.1} parent=11 // pred_fallthru
          _
        // Predicated region
        $region17: #{tpu_custom_call.1} parent=11 // pred_check
          %p280 = pneg %p125
        $region18: #{tpu_custom_call.1} parent=11 // pred_check_branch
          %282 = sbr.rel (%p280) target = $region20
        $region19: #{tpu_custom_call.1} parent=11 // pred_region
          %s284 = ssub.s32 128, 128
          %285 = vsyncadd [#allocation7], %s284
          %s286 = sshll.u32 [#allocation6], 4
          %s287 = int_to_ptr.vmem [resolvable:$true] %s286
          %292 = dma.hbm_to_vmem [thread:$0]  %s3, 128, %s287, [#allocation7], 64, 64, 4
        $region20: #{tpu_custom_call.1} parent=11 // pred_fallthru
          _
        // Predicated region
        $region21: #{tpu_custom_call.1} parent=11 // pred_check
          %p293 = pneg %p146
        $region22: #{tpu_custom_call.1} parent=11 // pred_check_branch
          %295 = sbr.rel (%p293) target = $region24
        $region23: #{tpu_custom_call.1} parent=11 // pred_region
          _
        $region24: #{tpu_custom_call.1} parent=11 // pred_fallthru
          _
        // Predicated region
        $region25: #{tpu_custom_call.1} parent=11 // pred_check
          %p296 = pneg %p172
        $region26: #{tpu_custom_call.1} parent=11 // pred_check_branch
          %298 = sbr.rel (%p296) target = $region28
        $region27: #{tpu_custom_call.1} parent=11 // pred_region
          %p299 = scmp.lt.s32.totalorder %s29, 0
          %s300 = scalar_select %p299, %s29, 0
          %s301 = smul.addr %s300, 4
          %s302 = scalar_lea.vmem %s5, %s301
        $region28: #{tpu_custom_call.1} parent=11 // pred_fallthru
          _
        // Predicated region
        $region29: #{tpu_custom_call.1} parent=11 // pred_check
          %p303 = pneg %p198
        $region30: #{tpu_custom_call.1} parent=11 // pred_check_branch
          %305 = sbr.rel (%p303) target = $region32
        $region31: #{tpu_custom_call.1} parent=11 // pred_region
          %p306 = scmp.lt.s32.totalorder %s29, 0
          %s307 = scalar_select %p306, %s29, 0
          %s308 = smul.addr %s307, 4
          %s309 = scalar_lea.vmem %s6, %s308
        $region32: #{tpu_custom_call.1} parent=11 // pred_fallthru
          _
        // Predicated region
        $region33: #{tpu_custom_call.1} parent=11 // pred_check
          %p310 = pneg %p224
        $region34: #{tpu_custom_call.1} parent=11 // pred_check_branch
          %312 = sbr.rel (%p310) target = $region36
        $region35: #{tpu_custom_call.1} parent=11 // pred_region
          %p313 = scmp.lt.s32.totalorder %s29, 0
          %s314 = scalar_select %p313, %s29, 0
          %s315 = scalar_lea.vmem %s7, %s314
        $region36: #{tpu_custom_call.1} parent=11 // pred_fallthru
          _
      $region12: #{tpu_custom_call.1} parent=5 // pred_fallthru
        _
      %p316 = scmp.lt.s32.totalorder %s19, 2
      // Predicated region
      $region37: #{tpu_custom_call.1} parent=5 // pred_check
        %p317 = pneg %p316
      $region38: #{tpu_custom_call.1} parent=5 // pred_check_branch
        %319 = sbr.rel (%p317) target = $region40
      $region39: #{tpu_custom_call.1} parent=5 // pred_region
        // Predicated region
        $region41: #{tpu_custom_call.1} parent=39 // pred_check
          %p320 = pneg %p51
        $region42: #{tpu_custom_call.1} parent=39 // pred_check_branch
          %322 = sbr.rel (%p320) target = $region44
        $region43: #{tpu_custom_call.1} parent=39 // pred_region
          %s323 = smul.u32 2, %s26
          %p324 = scmp.lt.s32.totalorder %s323, 3
          %s325 = scalar_select %p324, %s323, 3
          %s326 = smul.addr %s325, 4
          %s327 = scalar_lea.vmem %s0, %s326
          %s328 = smul.u32 2, %s26
        $region44: #{tpu_custom_call.1} parent=39 // pred_fallthru
          _
        // Predicated region
        $region45: #{tpu_custom_call.1} parent=39 // pred_check
          %p329 = pneg %p77
        $region46: #{tpu_custom_call.1} parent=39 // pred_check_branch
          %331 = sbr.rel (%p329) target = $region48
        $region47: #{tpu_custom_call.1} parent=39 // pred_region
          %s332 = smul.u32 2, %s26
          %p333 = scmp.lt.s32.totalorder %s332, 3
          %s334 = scalar_select %p333, %s332, 3
          %s335 = smul.addr %s334, 4
          %s336 = scalar_lea.vmem %s1, %s335
          %s337 = smul.u32 2, %s26
        $region48: #{tpu_custom_call.1} parent=39 // pred_fallthru
          _
      $region40: #{tpu_custom_call.1} parent=5 // pred_fallthru
        _
      %p338 = scmp.le.s32.totalorder 1, %s19
      %p339 = scmp.lt.s32.totalorder %s19, 3
      %p340 = pnand %p338, %p339
      %p341 = pneg %p340
      // Predicated region
      $region49: #{tpu_custom_call.1} parent=5 // pred_check
        _
      $region50: #{tpu_custom_call.1} parent=5 // pred_check_branch
        %343 = sbr.rel (%p340) target = $region52
      $region51: #{tpu_custom_call.1} parent=5 // pred_region
        %s344 = ssub.s32 %s19, 1
        // Predicated region
        $region53: #{tpu_custom_call.1} parent=51 // pred_check
          %p345 = pneg %p104
        $region54: #{tpu_custom_call.1} parent=51 // pred_check_branch
          %347 = sbr.rel (%p345) target = $region56
        $region55: #{tpu_custom_call.1} parent=51 // pred_region
          %348 = dma.done [#allocation4], 256
        $region56: #{tpu_custom_call.1} parent=51 // pred_fallthru
          _
        // Predicated region
        $region57: #{tpu_custom_call.1} parent=51 // pred_check
          %p349 = pneg %p125
        $region58: #{tpu_custom_call.1} parent=51 // pred_check_branch
          %351 = sbr.rel (%p349) target = $region60
        $region59: #{tpu_custom_call.1} parent=51 // pred_region
          %352 = dma.done [#allocation7], 128
        $region60: #{tpu_custom_call.1} parent=51 // pred_fallthru
          _
        %s353 = smul.u32 2, %s28
        %p354 = scmp.lt.s32.totalorder %s353, 3
        %s355 = scalar_select %p354, %s353, 3
        %s356 = smul.addr %s355, 4
        %s357 = scalar_lea.vmem %s0, %s356
        %p358 = pneg %p57
        %p359 = pneg %p54
        %s360 = smul.u32 2, %s28
        %p361 = scmp.lt.s32.totalorder %s360, 3
        %s362 = scalar_select %p361, %s360, 3
        %s363 = smul.addr %s362, 4
        %s364 = scalar_lea.vmem %s1, %s363
        %p365 = pneg %p83
        %p366 = pneg %p80
        %p367 = pneg %p104
        %p368 = pneg %p101
        %p369 = pneg %p125
        %p370 = pneg %p122
        %p371 = pneg %p146
        %p372 = pneg %p143
        %p373 = scmp.lt.s32.totalorder %s29, 0
        %s374 = scalar_select %p373, %s29, 0
        %s375 = smul.addr %s374, 4
        %s376 = scalar_lea.vmem %s5, %s375
        %p377 = pneg %p172
        %p378 = pneg %p169
        %p379 = scmp.lt.s32.totalorder %s29, 0
        %s380 = scalar_select %p379, %s29, 0
        %s381 = smul.addr %s380, 4
        %s382 = scalar_lea.vmem %s6, %s381
        %p383 = pneg %p198
        %p384 = pneg %p195
        %p385 = scmp.lt.s32.totalorder %s29, 0
        %s386 = scalar_select %p385, %s29, 0
        %s387 = scalar_lea.vmem %s7, %s386
        %p388 = pneg %p224
        %p389 = pneg %p221
        %p390 = pneg %p252
        %p391 = pneg %p249
        %s392 = sand.u32 %s239, 1
        %s393 = scalar_lea.sflag [#allocation5], %s392
        %s394 = sand.u32 %s239, 1
        %s395 = smul.addr %s394, 16
        %s396 = scalar_lea.vmem [#allocation8], %s395
        %s397 = smul.u32 2, %s28
        %p398 = scmp.lt.s32.totalorder %s397, 3
        %s399 = scalar_select %p398, %s397, 3
        %s400 = smul.addr %s399, 4
        %s401 = scalar_lea.vmem %s0, %s400
        %s402 = smul.u32 2, %s28
        %s403 = smul.u32 2, %s28
        %p404 = scmp.lt.s32.totalorder %s403, 3
        %s405 = scalar_select %p404, %s403, 3
        %s406 = smul.addr %s405, 4
        %s407 = scalar_lea.vmem %s1, %s406
        %s408 = smul.u32 2, %s28
        %p409 = scmp.lt.s32.totalorder %s29, 0
        %s410 = scalar_select %p409, %s29, 0
        %s411 = smul.addr %s410, 4
        %s412 = scalar_lea.vmem %s5, %s411
        %p413 = scmp.lt.s32.totalorder %s29, 0
        %s414 = scalar_select %p413, %s29, 0
        %s415 = smul.addr %s414, 4
        %s416 = scalar_lea.vmem %s6, %s415
        %p417 = scmp.lt.s32.totalorder %s29, 0
        %s418 = scalar_select %p417, %s29, 0
        %s419 = scalar_lea.vmem %s7, %s418
        %s420 = smul.u32 2, %s28
        %p422 = scmp.eq.s32.totalorder %s29, 0
        // Predicated region
        $region61: #{tpu_custom_call.1} parent=51 // pred_check
          %p423 = pneg %p422
        $region62: #{tpu_custom_call.1} parent=51 // pred_check_branch
          %425 = sbr.rel (%p423) target = $region64
        $region63: #{tpu_custom_call.1} parent=51 // pred_region
          %v426 = vld [vmem:[%s401] sm:$0xf]
          %v427 = vld [vmem:[%s401 + $0x4] sm:$0xf]
          %v428 = vld [vmem:[%s407] sm:$0xf]
          %v429 = vld [vmem:[%s407 + $0x4] sm:$0xf]
          %v430 = vld [vmem:[#allocation6] sm:$0xf]
          %v431 = vld [vmem:[#allocation6 + $0x4] sm:$0xf]
          %v434 = vunpack.c.l.b16 %v428
          %v435 = vunpack.c.l.b16 %v429
          %v436 = vpack.c.b16 %v435, %v434
          %v439 = vunpack.c.l.b16 %v430
          %v440 = vunpack.c.l.b16 %v431
          %v441 = vpack.c.b16 %v440, %v439
          %vm443 = vcmask 130048
          %v445 = vsel %vm443, %v436, 0
          %447 = vmatprep.subr.bf16.mxu0 0
          %448 = vmatpush1.bf16.msra.mxu0 %v441
          %449 = vmatprep.subr.bf16.mxu0 0
          %450 = vmatpush1.bf16.msra.mxu0 0
          %451 = vmatprep.subr.bf16.mxu0 0
          %452 = vmatpush1.bf16.msra.mxu0 0
          %453 = vmatprep.subr.bf16.mxu0 0
          %454 = vmatpush1.bf16.msra.mxu0 0
          %455 = vmatprep.subr.bf16.mxu0 0
          %456 = vmatpush1.bf16.msra.mxu0 0
          %457 = vmatprep.subr.bf16.mxu0 0
          %458 = vmatpush1.bf16.msra.mxu0 0
          %459 = vmatprep.subr.bf16.mxu0 0
          %460 = vmatpush1.bf16.msra.mxu0 0
          %461 = vmatprep.subr.bf16.mxu0 0
          %462 = vmatpush1.bf16.msra.mxu0 0
          %463 = vmatprep.subr.bf16.mxu0 0
          %464 = vmatpush1.bf16.msra.mxu0 0
          %465 = vmatprep.subr.bf16.mxu0 0
          %466 = vmatpush1.bf16.msra.mxu0 0
          %467 = vmatprep.subr.bf16.mxu0 0
          %468 = vmatpush1.bf16.msra.mxu0 0
          %469 = vmatprep.subr.bf16.mxu0 0
          %470 = vmatpush1.bf16.msra.mxu0 0
          %471 = vmatprep.subr.bf16.mxu0 0
          %472 = vmatpush1.bf16.msra.mxu0 0
          %473 = vmatprep.subr.bf16.mxu0 0
          %474 = vmatpush1.bf16.msra.mxu0 0
          %475 = vmatprep.subr.bf16.mxu0 0
          %476 = vmatpush1.bf16.msra.mxu0 0
          %477 = vmatprep.subr.bf16.mxu0 0
          %478 = vmatpush1.bf16.msra.mxu0 0
          %479 = vmatprep.mubr.bf16.mxu0 0
          %480 = vmatmul.mubr.bf16.gmra.mrb[0].mxu0 %v445
          %v481 = vpop.f32.mrb[0].mxu0
          %v482 = vadd.f32 0.0, %v481
          %v483 = vpop.f32.mrb[0].mxu0
          %v484 = vpop.f32.mrb[0].mxu0
          %v485 = vadd.f32 0.0, %v484
          %v486 = vpop.f32.mrb[0].mxu0
          %487 = vdwg.mxu0
          %v488 = vld [vmem:[%s4] sm:$0x1]
          %v489 = vld [vmem:[#allocation3] sm:$0xf]
          %v490 = vld [vmem:[#allocation3 + $0x4] sm:$0xf]
          %v491 = vld [vmem:[#allocation3 + $0x8] sm:$0xf]
          %v492 = vld [vmem:[#allocation3 + $0xc] sm:$0xf]
          %v495 = vunpack.c.l.b16 %v426
          %v496 = vunpack.c.l.b16 %v427
          %v497 = vpack.c.b16 %v496, %v495
          %v502 = vunpack.c.l.b16 %v489
          %v503 = vunpack.c.l.b16 %v490
          %v504 = vunpack.c.l.b16 %v491
          %v505 = vunpack.c.l.b16 %v492
          %v506 = vpack.c.b16 %v503, %v502
          %v507 = vpack.c.b16 %v505, %v504
          %vm510 = vcmask 261120
          %v512 = vsel %vm510, %v497, 0
          %514 = vmatprep.subr.bf16.mxu0 0
          %515 = vmatpush1.bf16.msra.mxu0 %v506
          %516 = vmatprep.subr.bf16.mxu0 0
          %517 = vmatpush1.bf16.msra.mxu0 %v507
          %518 = vmatprep.subr.bf16.mxu0 0
          %519 = vmatpush1.bf16.msra.mxu0 0
          %520 = vmatprep.subr.bf16.mxu0 0
          %521 = vmatpush1.bf16.msra.mxu0 0
          %522 = vmatprep.subr.bf16.mxu0 0
          %523 = vmatpush1.bf16.msra.mxu0 0
          %524 = vmatprep.subr.bf16.mxu0 0
          %525 = vmatpush1.bf16.msra.mxu0 0
          %526 = vmatprep.subr.bf16.mxu0 0
          %527 = vmatpush1.bf16.msra.mxu0 0
          %528 = vmatprep.subr.bf16.mxu0 0
          %529 = vmatpush1.bf16.msra.mxu0 0
          %530 = vmatprep.subr.bf16.mxu0 0
          %531 = vmatpush1.bf16.msra.mxu0 0
          %532 = vmatprep.subr.bf16.mxu0 0
          %533 = vmatpush1.bf16.msra.mxu0 0
          %534 = vmatprep.subr.bf16.mxu0 0
          %535 = vmatpush1.bf16.msra.mxu0 0
          %536 = vmatprep.subr.bf16.mxu0 0
          %537 = vmatpush1.bf16.msra.mxu0 0
          %538 = vmatprep.subr.bf16.mxu0 0
          %539 = vmatpush1.bf16.msra.mxu0 0
          %540 = vmatprep.subr.bf16.mxu0 0
          %541 = vmatpush1.bf16.msra.mxu0 0
          %542 = vmatprep.subr.bf16.mxu0 0
          %543 = vmatpush1.bf16.msra.mxu0 0
          %544 = vmatprep.subr.bf16.mxu0 0
          %545 = vmatpush1.bf16.msra.mxu0 0
          %546 = vmatprep.mubr.bf16.mxu0 0
          %547 = vmatmul.mubr.bf16.gmra.mrb[0].mxu0 %v512
          %v548 = vpop.f32.mrb[0].mxu0
          %v549 = vadd.f32 %v482, %v548
          %v550 = vpop.f32.mrb[0].mxu0
          %v551 = vpop.f32.mrb[0].mxu0
          %v552 = vadd.f32 %v485, %v551
          %v553 = vpop.f32.mrb[0].mxu0
          %554 = vdwg.mxu0
          %v556 = vlaneseq
          %v557 = vshrl.u32 %v556, 7
          %v558 = vsub.s32 0, %v557
          %v559 = vrot.slane %v488, %v558
          %v561 = vadd.f32 %v549, %v559
          %v562 = vadd.f32 %v552, %v559
          %v563 = vmax.f32 %v561, 0.0
          %v564 = vmax.f32 %v562, 0.0
          %v565 = vpack.c.bf16 %v564, %v563
          %566 = vst.msk [vmem:[#allocation2] sm:$0xff] %vm510, %v565
        $region64: #{tpu_custom_call.1} parent=51 // pred_fallthru
          _
        %v567 = vld [vmem:[#allocation2] sm:$0xff]
        %v568 = vld [vmem:[%s412] sm:$0xf]
        %v569 = vld [vmem:[%s412 + $0x4] sm:$0xf]
        %v570 = vld [vmem:[%s412 + $0x8] sm:$0xf]
        %v571 = vld [vmem:[%s412 + $0xc] sm:$0xf]
        %v572 = vld [vmem:[%s407] sm:$0xf]
        %v573 = vld [vmem:[%s407 + $0x4] sm:$0xf]
        %v574 = vld [vmem:[%s416] sm:$0xf]
        %v575 = vld [vmem:[%s416 + $0x4] sm:$0xf]
        %v578 = vunpack.c.l.b16 %v572
        %v579 = vunpack.c.l.b16 %v573
        %v580 = vpack.c.b16 %v579, %v578
        %v583 = vunpack.c.l.b16 %v574
        %v584 = vunpack.c.l.b16 %v575
        %v585 = vpack.c.b16 %v584, %v583
        %vm587 = vcmask 130048
        %v589 = vsel %vm587, %v580, 0
        %591 = vmatprep.subr.bf16.mxu0 0
        %592 = vmatpush1.bf16.msra.mxu0 %v585
        %593 = vmatprep.subr.bf16.mxu0 0
        %594 = vmatpush1.bf16.msra.mxu0 0
        %595 = vmatprep.subr.bf16.mxu0 0
        %596 = vmatpush1.bf16.msra.mxu0 0
        %597 = vmatprep.subr.bf16.mxu0 0
        %598 = vmatpush1.bf16.msra.mxu0 0
        %599 = vmatprep.subr.bf16.mxu0 0
        %600 = vmatpush1.bf16.msra.mxu0 0
        %601 = vmatprep.subr.bf16.mxu0 0
        %602 = vmatpush1.bf16.msra.mxu0 0
        %603 = vmatprep.subr.bf16.mxu0 0
        %604 = vmatpush1.bf16.msra.mxu0 0
        %605 = vmatprep.subr.bf16.mxu0 0
        %606 = vmatpush1.bf16.msra.mxu0 0
        %607 = vmatprep.subr.bf16.mxu0 0
        %608 = vmatpush1.bf16.msra.mxu0 0
        %609 = vmatprep.subr.bf16.mxu0 0
        %610 = vmatpush1.bf16.msra.mxu0 0
        %611 = vmatprep.subr.bf16.mxu0 0
        %612 = vmatpush1.bf16.msra.mxu0 0
        %613 = vmatprep.subr.bf16.mxu0 0
        %614 = vmatpush1.bf16.msra.mxu0 0
        %615 = vmatprep.subr.bf16.mxu0 0
        %616 = vmatpush1.bf16.msra.mxu0 0
        %617 = vmatprep.subr.bf16.mxu0 0
        %618 = vmatpush1.bf16.msra.mxu0 0
        %619 = vmatprep.subr.bf16.mxu0 0
        %620 = vmatpush1.bf16.msra.mxu0 0
        %621 = vmatprep.subr.bf16.mxu0 0
        %622 = vmatpush1.bf16.msra.mxu0 0
        %623 = vmatprep.mubr.bf16.mxu0 0
        %624 = vmatmul.mubr.bf16.gmra.mrb[0].mxu0 %v589
        %v625 = vpop.f32.mrb[0].mxu0
        %v626 = vadd.f32 0.0, %v625
        %v627 = vpop.f32.mrb[0].mxu0
        %v628 = vpop.f32.mrb[0].mxu0
        %v629 = vadd.f32 0.0, %v628
        %v630 = vpop.f32.mrb[0].mxu0
        %631 = vdwg.mxu0
        %v636 = vunpack.c.l.b16 %v568
        %v637 = vunpack.c.l.b16 %v569
        %v638 = vunpack.c.l.b16 %v570
        %v639 = vunpack.c.l.b16 %v571
        %v640 = vpack.c.b16 %v637, %v636
        %v641 = vpack.c.b16 %v639, %v638
        %vm644 = vcmask 261120
        %v646 = vsel %vm644, %v567, 0
        %648 = vmatprep.subr.bf16.mxu0 0
        %649 = vmatpush1.bf16.msra.mxu0 %v640
        %650 = vmatprep.subr.bf16.mxu0 0
        %651 = vmatpush1.bf16.msra.mxu0 %v641
        %652 = vmatprep.subr.bf16.mxu0 0
        %653 = vmatpush1.bf16.msra.mxu0 0
        %654 = vmatprep.subr.bf16.mxu0 0
        %655 = vmatpush1.bf16.msra.mxu0 0
        %656 = vmatprep.subr.bf16.mxu0 0
        %657 = vmatpush1.bf16.msra.mxu0 0
        %658 = vmatprep.subr.bf16.mxu0 0
        %659 = vmatpush1.bf16.msra.mxu0 0
        %660 = vmatprep.subr.bf16.mxu0 0
        %661 = vmatpush1.bf16.msra.mxu0 0
        %662 = vmatprep.subr.bf16.mxu0 0
        %663 = vmatpush1.bf16.msra.mxu0 0
        %664 = vmatprep.subr.bf16.mxu0 0
        %665 = vmatpush1.bf16.msra.mxu0 0
        %666 = vmatprep.subr.bf16.mxu0 0
        %667 = vmatpush1.bf16.msra.mxu0 0
        %668 = vmatprep.subr.bf16.mxu0 0
        %669 = vmatpush1.bf16.msra.mxu0 0
        %670 = vmatprep.subr.bf16.mxu0 0
        %671 = vmatpush1.bf16.msra.mxu0 0
        %672 = vmatprep.subr.bf16.mxu0 0
        %673 = vmatpush1.bf16.msra.mxu0 0
        %674 = vmatprep.subr.bf16.mxu0 0
        %675 = vmatpush1.bf16.msra.mxu0 0
        %676 = vmatprep.subr.bf16.mxu0 0
        %677 = vmatpush1.bf16.msra.mxu0 0
        %678 = vmatprep.subr.bf16.mxu0 0
        %679 = vmatpush1.bf16.msra.mxu0 0
        %680 = vmatprep.mubr.bf16.mxu0 0
        %681 = vmatmul.mubr.bf16.gmra.mrb[0].mxu0 %v646
        %v682 = vpop.f32.mrb[0].mxu0
        %v683 = vadd.f32 %v626, %v682
        %v684 = vpop.f32.mrb[0].mxu0
        %v685 = vpop.f32.mrb[0].mxu0
        %v686 = vadd.f32 %v629, %v685
        %v687 = vpop.f32.mrb[0].mxu0
        %688 = vdwg.mxu0
        %v689 = vld [vmem:[%s419] sm:$0x1]
        %v691 = vlaneseq
        %v692 = vshrl.u32 %v691, 7
        %v693 = vsub.s32 0, %v692
        %v694 = vrot.slane %v689, %v693
        %v696 = vadd.f32 %v683, %v694
        %v697 = vadd.f32 %v686, %v694
        %v698 = vmax.f32 %v696, 0.0
        %v699 = vmax.f32 %v697, 0.0
        %700 = vst [vmem:[%s396] sm:$0xff] %v698
        %701 = vst [vmem:[%s396 + $0x8] sm:$0xff] %v699
        %s702 = sand.u32 %s239, 1
        %s703 = scalar_lea.sflag [#allocation5], %s702
        %s704 = sand.u32 %s239, 1
        %s705 = smul.addr %s704, 16
        %s706 = scalar_lea.vmem [#allocation8], %s705
        // Predicated region
        $region65: #{tpu_custom_call.1} parent=51 // pred_check
          %p707 = pneg %p249
        $region66: #{tpu_custom_call.1} parent=51 // pred_check_branch
          %709 = sbr.rel (%p707) target = $region68
        $region67: #{tpu_custom_call.1} parent=51 // pred_region
          %s710 = smul.u32 2, %s28
          %s712 = ssub.s32 256, 256
          %713 = vsyncadd %s703, %s712
          %s714 = sadd.s32 %s29, %s710
          %s715 = smul.addr %s714, 128
          %s716 = scalar_lea.hbm %s8, %s715
          %s717 = sshll.u32 %s706, 4
          %s718 = int_to_ptr.vmem [resolvable:$true] %s717
          %723 = dma.vmem_to_hbm [thread:$0]  %s718, 256, %s716, %s703, 128, 128, 8
        $region68: #{tpu_custom_call.1} parent=51 // pred_fallthru
          _
      $region52: #{tpu_custom_call.1} parent=5 // pred_fallthru
        _
      %p724 = scmp.le.s32.totalorder 2, %s19
      // Predicated region
      $region69: #{tpu_custom_call.1} parent=5 // pred_check
        %p725 = pneg %p724
      $region70: #{tpu_custom_call.1} parent=5 // pred_check_branch
        %727 = sbr.rel (%p725) target = $region72
      $region71: #{tpu_custom_call.1} parent=5 // pred_region
        %s728 = ssub.s32 %s19, 2
        // Predicated region
        $region73: #{tpu_custom_call.1} parent=71 // pred_check
          %p729 = pneg %p255
        $region74: #{tpu_custom_call.1} parent=71 // pred_check_branch
          %731 = sbr.rel (%p729) target = $region76
        $region75: #{tpu_custom_call.1} parent=71 // pred_region
          %s732 = sand.u32 %s240, 1
          %s733 = scalar_lea.sflag [#allocation5], %s732
          %s734 = sand.u32 %s240, 1
          %s735 = smul.addr %s734, 16
          %s736 = scalar_lea.vmem [#allocation8], %s735
          %737 = dma.done %s733, 256
        $region76: #{tpu_custom_call.1} parent=71 // pred_fallthru
          _
      $region72: #{tpu_custom_call.1} parent=5 // pred_fallthru
        _
    $region6: #{tpu_custom_call.1} parent=1 // loop_footer
      %s23 = sadd.s32 1, %s19
    $region7: #{tpu_custom_call.1} parent=1 // loop_footer_branch
      %18 = sbr.rel target = $region3
    $region8: #{tpu_custom_call.1} parent=1 // loop_exit
      _
    %738 = vsyncpa [#allocation4], 1
    %s739 = scalar_lea.sflag [#allocation4], 1
    %740 = vsyncpa %s739, 1
    %741 = vsyncpa [#allocation7], 1
    %742 = vsyncpa [#allocation5], 1
    %s743 = scalar_lea.sflag [#allocation5], 1
    %744 = vsyncpa %s743, 1

</llo_original>
